<compile_context>
chip_gen: v7x
topology: tpu7x:2x2x1
jax: 0.10.0
libtpu: 0.0.40
codegen_flags: <defaults>
</compile_context>

<pallas_src>
import jax
import jax.numpy as jnp
from jax.experimental import pallas as pl
from jax.experimental.pallas import tpu as pltpu

SELU_ALPHA = 1.6732632423543772848170429916717
SELU_SCALE = 1.0507009873554804934193349852946

# Lane-dense padded hidden widths: 80 -> 128, 140 -> 256.
H1_P, H2_P = 128, 256
D_IN1, D_H1, D_H2, D_OUT = 1, 80, 140, 200


def _selu_core(x):
    """SELU without the trailing scale (scale is folded into the next layer)."""
    return jnp.where(x > 0, x, SELU_ALPHA * (jnp.exp(jnp.minimum(x, 0.0)) - 1.0))


def mlp_lat_kernel(x_ref, w1_ref, b1_ref, w2_ref, b2_ref, w3_ref, b3_ref, o_ref):
    x = x_ref[...]                                                   # (TB, 1) f32

    # Layer 1 has K=1: VPU broadcast multiply-add instead of an MXU matmul
    # whose contraction dim would be padded 1 -> 128.
    h1 = _selu_core(x * w1_ref[...] + b1_ref[...])                   # (TB, 128) f32

    # Layer 2: MXU matmul, operands in the (possibly bf16) weight dtype,
    # f32 accumulation; SELU scale already folded into w2.
    z2 = jnp.dot(h1.astype(w2_ref.dtype), w2_ref[...],
                 preferred_element_type=jnp.float32) + b2_ref[...]   # (TB, 256) f32
    h2 = _selu_core(z2)

    # Layer 3: output N dim is the real 200 (block last dim == full array dim).
    z3 = jnp.dot(h2.astype(w3_ref.dtype), w3_ref[...],
                 preferred_element_type=jnp.float32) + b3_ref[...]   # (TB, 200) f32
    # Final layer keeps the full SELU (with scale).
    o_ref[...] = (SELU_SCALE * _selu_core(z3)).astype(o_ref.dtype)


def _pad2(a, rows, cols):
    return jnp.pad(a, ((0, rows - a.shape[0]), (0, cols - a.shape[1])))


def mlp_lat_forward(x, params, *, tile_b=2048, use_bf16_matmul=True):
    """x: (N, 1) float32. params: (in, out) weights, (1, out) biases."""
    n = x.shape[0]

    # Adaptive tile: large tiles amortize the ~0.35 us per-grid-step overhead
    # on big batches, but tiny batches aren't padded out to 2048 rows.
    tb = int(min(tile_b, max(8, pl.next_power_of_2(max(n, 1)))))
    tb = max(8, (tb // 8) * 8)                       # sublane-aligned

    wdt = jnp.bfloat16 if use_bf16_matmul else jnp.float32

    # Zero-pad feature dims to lane-dense widths.  Padded weight rows/cols and
    # bias entries are zero and SELU(0) == 0, so the real columns are exact.
    w1 = _pad2(params["w1"], 1, H1_P)                               # (1, 128) f32
    b1 = _pad2(params["b1"], 1, H1_P)                               # (1, 128) f32
    # Fold SELU scale of layers 1 and 2 into the following weight matrices
    # (one-time tiny op); cast matmul weights to bf16 on the fast path.
    w2 = (_pad2(params["w2"], H1_P, H2_P) * SELU_SCALE).astype(wdt)  # (128, 256)
    b2 = _pad2(params["b2"], 1, H2_P)                                # (1, 256) f32
    w3 = (_pad2(params["w3"], H2_P, D_OUT) * SELU_SCALE).astype(wdt)  # (256, 200)
    b3 = params["b3"]                                                # (1, 200) f32

    # Pad the batch to a multiple of the tile; padded rows are dropped at end.
    n_pad = pl.cdiv(n, tb) * tb
    if n_pad != n:
        x = jnp.pad(x, ((0, n_pad - n), (0, 0)))
    grid = (n_pad // tb,)

    full = lambda arr: pl.BlockSpec(arr.shape, lambda i: (0, 0))  # grid-invariant

    wbytes = lambda a: a.size * a.dtype.itemsize
    flops = 2 * n_pad * (H1_P + H1_P * H2_P + H2_P * D_OUT)
    transcendentals = n_pad * (H1_P + H2_P + D_OUT)          # one exp per SELU elem
    bytes_accessed = (n_pad * 4 * (1 + D_OUT)
                      + sum(wbytes(a) for a in (w1, b1, w2, b2, w3, b3)))

    out = pl.pallas_call(
        mlp_lat_kernel,
        out_shape=jax.ShapeDtypeStruct((n_pad, D_OUT), jnp.float32),
        grid_spec=pltpu.PrefetchScalarGridSpec(
            num_scalar_prefetch=0,
            grid=grid,
            in_specs=[
                pl.BlockSpec((tb, 1), lambda i: (i, 0)),    # x tile
                full(w1), full(b1),
                full(w2), full(b2),
                full(w3), full(b3),
            ],
            out_specs=pl.BlockSpec((tb, D_OUT), lambda i: (i, 0)),
        ),
        compiler_params=pltpu.CompilerParams(
            dimension_semantics=("parallel",),
            # ~14 MiB live at tb=2048 (incl. lane-padded x buffers); fits the
            # 32 MiB scoped limit on v5e/v6e and v7x's 64 MiB physical VMEM.
            vmem_limit_bytes=32 * 1024 * 1024,
        ),
        cost_estimate=pl.CostEstimate(
            flops=flops,
            transcendentals=transcendentals,
            bytes_accessed=bytes_accessed,
        ),
    )(x, w1, b1, w2, b2, w3, b3)

    return out[:n] if n_pad != n else out


def init_params(key):
    """Deterministic synthetic params with the PyTorch module's shapes,
    stored pre-transposed as (in, out); biases as (1, out)."""
    dims = [(D_IN1, D_H1), (D_H1, D_H2), (D_H2, D_OUT)]
    params = {}
    for idx, (fan_in, fan_out) in enumerate(dims, start=1):
        key, kw, kb = jax.random.split(key, 3)
        bound = 1.0 / jnp.sqrt(fan_in)  # matches nn.Linear default init range
        params[f"w{idx}"] = jax.random.uniform(
            kw, (fan_in, fan_out), jnp.float32, -bound, bound)
        params[f"b{idx}"] = jax.random.uniform(
            kb, (1, fan_out), jnp.float32, -bound, bound)
    return params


def mlp_lat_reference(x, params):
    h = x
    for i in (1, 2, 3):
        h = jax.nn.selu(h @ params[f"w{i}"] + params[f"b{i}"])
    return h


if __name__ == "__main__":
    key = jax.random.PRNGKey(0)
    key, kx = jax.random.split(key)

    N = 96                                   # small batch, not a power of two
    x = jax.random.normal(kx, (N, 1), jnp.float32)
    params = init_params(key)
    ref = mlp_lat_reference(x, params)

    # Exact f32 path, small explicit tile -> exercises the multi-step grid.
    out_f32 = jax.block_until_ready(
        mlp_lat_forward(x, params, tile_b=32, use_bf16_matmul=False))
    assert out_f32.shape == (N, D_OUT)
    assert jnp.allclose(out_f32, ref, atol=1e-5, rtol=1e-5)

    # Default fast path: bf16 MXU operands, adaptive single tile here.
    out_fast = jax.block_until_ready(mlp_lat_forward(x, params))
    assert out_fast.shape == (N, D_OUT)
    assert jnp.allclose(out_fast, ref, atol=5e-2, rtol=5e-2)

    print("KERNEL_OK")
</pallas_src>

<mosaic_0001>
module attributes {stable_mosaic.version = 11 : i64} {
  func.func @mlp_lat_kernel(%arg0: i32, %arg1: memref<32x1xf32, #tpu.memory_space<vmem>>, %arg2: memref<1x128xf32, #tpu.memory_space<vmem>>, %arg3: memref<1x128xf32, #tpu.memory_space<vmem>>, %arg4: memref<128x256xf32, #tpu.memory_space<vmem>>, %arg5: memref<1x256xf32, #tpu.memory_space<vmem>>, %arg6: memref<256x200xf32, #tpu.memory_space<vmem>>, %arg7: memref<1x200xf32, #tpu.memory_space<vmem>>, %arg8: memref<32x200xf32, #tpu.memory_space<vmem>>) attributes {dimension_semantics = [#tpu.dimension_semantics<parallel>], iteration_bounds = array<i64: 3>, scalar_prefetch = 0 : i64, scratch_operands = 0 : i64, tpu.core_type = #tpu.core_type<tc>, window_params = [{transform_indices = @transform_0, window_bounds = array<i64: 32, 1>}, {pipeline_mode = #tpu.pipeline_mode<synchronous>, transform_indices = @transform_1, window_bounds = array<i64: 1, 128>}, {pipeline_mode = #tpu.pipeline_mode<synchronous>, transform_indices = @transform_2, window_bounds = array<i64: 1, 128>}, {pipeline_mode = #tpu.pipeline_mode<synchronous>, transform_indices = @transform_3, window_bounds = array<i64: 128, 256>}, {pipeline_mode = #tpu.pipeline_mode<synchronous>, transform_indices = @transform_4, window_bounds = array<i64: 1, 256>}, {pipeline_mode = #tpu.pipeline_mode<synchronous>, transform_indices = @transform_5, window_bounds = array<i64: 256, 200>}, {pipeline_mode = #tpu.pipeline_mode<synchronous>, transform_indices = @transform_6, window_bounds = array<i64: 1, 200>}, {transform_indices = @transform_7, window_bounds = array<i64: 32, 200>}]} {
    %c0 = arith.constant 0 : index
    %c0_0 = arith.constant 0 : index
    %0 = vector.load %arg1[%c0, %c0_0] : memref<32x1xf32, #tpu.memory_space<vmem>>, vector<32x1xf32>
    %c0_1 = arith.constant 0 : index
    %c0_2 = arith.constant 0 : index
    %1 = vector.load %arg2[%c0_1, %c0_2] : memref<1x128xf32, #tpu.memory_space<vmem>>, vector<1x128xf32>
    %2 = vector.broadcast %0 : vector<32x1xf32> to vector<32x128xf32>
    %3 = vector.broadcast %1 : vector<1x128xf32> to vector<32x128xf32>
    %4 = arith.mulf %2, %3 : vector<32x128xf32>
    %c0_3 = arith.constant 0 : index
    %c0_4 = arith.constant 0 : index
    %5 = vector.load %arg3[%c0_3, %c0_4] : memref<1x128xf32, #tpu.memory_space<vmem>>, vector<1x128xf32>
    %6 = vector.broadcast %5 : vector<1x128xf32> to vector<32x128xf32>
    %7 = arith.addf %4, %6 : vector<32x128xf32>
    %cst = arith.constant 0.000000e+00 : f32
    %8 = vector.broadcast %cst : f32 to vector<32x128xf32>
    %9 = arith.cmpf ogt, %7, %8 : vector<32x128xf32>
    %cst_5 = arith.constant 0.000000e+00 : f32
    %10 = vector.broadcast %cst_5 : f32 to vector<32x128xf32>
    %11 = arith.minimumf %7, %10 : vector<32x128xf32>
    %12 = math.exp %11 : vector<32x128xf32>
    %cst_6 = arith.constant 1.000000e+00 : f32
    %13 = vector.broadcast %cst_6 : f32 to vector<32x128xf32>
    %14 = arith.subf %12, %13 : vector<32x128xf32>
    %cst_7 = arith.constant 1.67326319 : f32
    %15 = vector.broadcast %cst_7 : f32 to vector<32x128xf32>
    %16 = arith.mulf %15, %14 : vector<32x128xf32>
    %17 = arith.select %9, %7, %16 : vector<32x128xi1>, vector<32x128xf32>
    %c0_8 = arith.constant 0 : index
    %c0_9 = arith.constant 0 : index
    %18 = vector.load %arg4[%c0_8, %c0_9] : memref<128x256xf32, #tpu.memory_space<vmem>>, vector<128x256xf32>
    %cst_10 = arith.constant dense<0.000000e+00> : vector<32x256xf32>
    %19 = tpu.matmul %17, %18, %cst_10 {dimension_numbers = #tpu.dot_dimension_numbers<[1], [0], [0], [1], [0, 0, 1, 1], [], []>} : vector<32x128xf32>, vector<128x256xf32>, vector<32x256xf32> -> vector<32x256xf32>
    %c0_11 = arith.constant 0 : index
    %c0_12 = arith.constant 0 : index
    %20 = vector.load %arg5[%c0_11, %c0_12] : memref<1x256xf32, #tpu.memory_space<vmem>>, vector<1x256xf32>
    %21 = vector.broadcast %20 : vector<1x256xf32> to vector<32x256xf32>
    %22 = arith.addf %19, %21 : vector<32x256xf32>
    %cst_13 = arith.constant 0.000000e+00 : f32
    %23 = vector.broadcast %cst_13 : f32 to vector<32x256xf32>
    %24 = arith.cmpf ogt, %22, %23 : vector<32x256xf32>
    %cst_14 = arith.constant 0.000000e+00 : f32
    %25 = vector.broadcast %cst_14 : f32 to vector<32x256xf32>
    %26 = arith.minimumf %22, %25 : vector<32x256xf32>
    %27 = math.exp %26 : vector<32x256xf32>
    %cst_15 = arith.constant 1.000000e+00 : f32
    %28 = vector.broadcast %cst_15 : f32 to vector<32x256xf32>
    %29 = arith.subf %27, %28 : vector<32x256xf32>
    %cst_16 = arith.constant 1.67326319 : f32
    %30 = vector.broadcast %cst_16 : f32 to vector<32x256xf32>
    %31 = arith.mulf %30, %29 : vector<32x256xf32>
    %32 = arith.select %24, %22, %31 : vector<32x256xi1>, vector<32x256xf32>
    %c0_17 = arith.constant 0 : index
    %c0_18 = arith.constant 0 : index
    %33 = vector.load %arg6[%c0_17, %c0_18] : memref<256x200xf32, #tpu.memory_space<vmem>>, vector<256x200xf32>
    %cst_19 = arith.constant dense<0.000000e+00> : vector<32x200xf32>
    %34 = tpu.matmul %32, %33, %cst_19 {dimension_numbers = #tpu.dot_dimension_numbers<[1], [0], [0], [1], [0, 0, 1, 1], [], []>} : vector<32x256xf32>, vector<256x200xf32>, vector<32x200xf32> -> vector<32x200xf32>
    %c0_20 = arith.constant 0 : index
    %c0_21 = arith.constant 0 : index
    %35 = vector.load %arg7[%c0_20, %c0_21] : memref<1x200xf32, #tpu.memory_space<vmem>>, vector<1x200xf32>
    %36 = vector.broadcast %35 : vector<1x200xf32> to vector<32x200xf32>
    %37 = arith.addf %34, %36 : vector<32x200xf32>
    %cst_22 = arith.constant 0.000000e+00 : f32
    %38 = vector.broadcast %cst_22 : f32 to vector<32x200xf32>
    %39 = arith.cmpf ogt, %37, %38 : vector<32x200xf32>
    %cst_23 = arith.constant 0.000000e+00 : f32
    %40 = vector.broadcast %cst_23 : f32 to vector<32x200xf32>
    %41 = arith.minimumf %37, %40 : vector<32x200xf32>
    %42 = math.exp %41 : vector<32x200xf32>
    %cst_24 = arith.constant 1.000000e+00 : f32
    %43 = vector.broadcast %cst_24 : f32 to vector<32x200xf32>
    %44 = arith.subf %42, %43 : vector<32x200xf32>
    %cst_25 = arith.constant 1.67326319 : f32
    %45 = vector.broadcast %cst_25 : f32 to vector<32x200xf32>
    %46 = arith.mulf %45, %44 : vector<32x200xf32>
    %47 = arith.select %39, %37, %46 : vector<32x200xi1>, vector<32x200xf32>
    %cst_26 = arith.constant 1.05070102 : f32
    %48 = vector.broadcast %cst_26 : f32 to vector<32x200xf32>
    %49 = arith.mulf %48, %47 : vector<32x200xf32>
    %c0_27 = arith.constant 0 : index
    %c0_28 = arith.constant 0 : index
    %50 = vector.load %arg8[%c0_27, %c0_28] : memref<32x200xf32, #tpu.memory_space<vmem>>, vector<32x200xf32>
    tpu.vector_store %arg8[%c0_27, %c0_28], %49 {strides = array<i32>} : memref<32x200xf32, #tpu.memory_space<vmem>>, vector<32x200xf32>,
    return
  }
  func.func @transform_0(%arg0: i32) -> (i32, i32) {
    %c0_i32 = arith.constant 0 : i32
    %c0_i32_0 = arith.constant 0 : i32
    return %arg0, %c0_i32 : i32, i32
  }
  func.func @transform_1(%arg0: i32) -> (i32, i32) {
    %c0_i32 = arith.constant 0 : i32
    %c0_i32_0 = arith.constant 0 : i32
    %c0_i32_1 = arith.constant 0 : i32
    return %c0_i32, %c0_i32_0 : i32, i32
  }
  func.func @transform_2(%arg0: i32) -> (i32, i32) {
    %c0_i32 = arith.constant 0 : i32
    %c0_i32_0 = arith.constant 0 : i32
    %c0_i32_1 = arith.constant 0 : i32
    return %c0_i32, %c0_i32_0 : i32, i32
  }
  func.func @transform_3(%arg0: i32) -> (i32, i32) {
    %c0_i32 = arith.constant 0 : i32
    %c0_i32_0 = arith.constant 0 : i32
    %c0_i32_1 = arith.constant 0 : i32
    return %c0_i32, %c0_i32_0 : i32, i32
  }
  func.func @transform_4(%arg0: i32) -> (i32, i32) {
    %c0_i32 = arith.constant 0 : i32
    %c0_i32_0 = arith.constant 0 : i32
    %c0_i32_1 = arith.constant 0 : i32
    return %c0_i32, %c0_i32_0 : i32, i32
  }
  func.func @transform_5(%arg0: i32) -> (i32, i32) {
    %c0_i32 = arith.constant 0 : i32
    %c0_i32_0 = arith.constant 0 : i32
    %c0_i32_1 = arith.constant 0 : i32
    return %c0_i32, %c0_i32_0 : i32, i32
  }
  func.func @transform_6(%arg0: i32) -> (i32, i32) {
    %c0_i32 = arith.constant 0 : i32
    %c0_i32_0 = arith.constant 0 : i32
    %c0_i32_1 = arith.constant 0 : i32
    return %c0_i32, %c0_i32_0 : i32, i32
  }
  func.func @transform_7(%arg0: i32) -> (i32, i32) {
    %c0_i32 = arith.constant 0 : i32
    %c0_i32_0 = arith.constant 0 : i32
    return %arg0, %c0_i32 : i32, i32
  }
}

</mosaic_0001>

<llo_original>
// kernel: tpu_custom_call.1
$region0: #{tpu_custom_call.1}
  #allocation0 [shape = 'u32[]', space=smem, size = 0x4, offset = 0x4, fixed_abs, tag = 'smem constant byte address 0x4 - core index']
  #allocation1 [shape = 'u32[144,128]{1,0:T(1,128)}', space=vmem, size = 0x12000, scoped, tag = 'internal scratch']
  %s0 = inlined_call_operand.vmem [shape: f32[96,1], index: 0, kind: input, shape index: {}]
  %s1 = inlined_call_operand.vmem [shape: f32[1,128], index: 1, kind: input, shape index: {}]
  %s2 = inlined_call_operand.vmem [shape: f32[1,128], index: 2, kind: input, shape index: {}]
  %s3 = inlined_call_operand.vmem [shape: f32[128,256], index: 3, kind: input, shape index: {}]
  %s4 = inlined_call_operand.vmem [shape: f32[1,256], index: 4, kind: input, shape index: {}]
  %s5 = inlined_call_operand.vmem [shape: f32[256,200], index: 5, kind: input, shape index: {}]
  %s6 = inlined_call_operand.vmem [shape: f32[1,200], index: 6, kind: input, shape index: {}]
  %s7 = inlined_call_operand.hbm [shape: f32[96,200], index: 7, kind: output, shape index: {}]
  %s8 = sld [smem:[#allocation0]]
  $region61: #{tpu_custom_call.1} parent=0
    _
  %s10 = ssub.s32 1, %s8
  %s11 = scalar_select 0, %s10, %s8
  $region1: #{tpu_custom_call.1} parent=0
    #allocation2 [shape = 'u8[65536]{0}', space=vmem, size = 0x10000, scoped, tag = 'output window, operand 0']
    #allocation3 [shape = 's32[2]{0}', space=sflag, size = 0x8, scoped, tag = 'scoped memory for tpu_custom_call.1']
    %12 = vsyncpa [#allocation3], 0
    %s13 = scalar_lea.sflag [#allocation3], 1
    %14 = vsyncpa %s13, 0
    loop: start=0, step=1, limit=5
    $region2: #{tpu_custom_call.1} parent=1 // loop_pre_header
      _
    $region3: #{tpu_custom_call.1} parent=1 // loop_header
      %s16 = sphi 0, %s20
      %p17 = scmp.ge.s32.totalorder %s16, 5
      %s26 = sphi 0, %s28
      %s29 = sphi 0, %s26
      %s30 = sphi 0, %s29
      %s46 = sphi 0, %s30
      %s50 = sphi 0, %s50
      %s52 = sphi 0, %s50
      %s53 = sphi 0, %s52
      %s67 = sphi 0, %s53
      %s71 = sphi 0, %s71
      %s73 = sphi 0, %s71
      %s74 = sphi 0, %s73
      %s88 = sphi 0, %s74
      %s92 = sphi 0, %s92
      %s94 = sphi 0, %s92
      %s95 = sphi 0, %s94
      %s109 = sphi 0, %s95
      %s113 = sphi 0, %s113
      %s115 = sphi 0, %s113
      %s116 = sphi 0, %s115
      %s130 = sphi 0, %s116
      %s134 = sphi 0, %s134
      %s136 = sphi 0, %s134
      %s137 = sphi 0, %s136
      %s151 = sphi 0, %s137
      %s155 = sphi 0, %s155
      %s157 = sphi 0, %s155
      %s158 = sphi 0, %s157
      %s172 = sphi 0, %s158
      %s178 = sphi 0, %s180
      %s181 = sphi 0, %s178
      %s182 = sphi 0, %s181
      %s198 = sphi 0, %s182
    $region4: #{tpu_custom_call.1} parent=1 // loop_header_branch
      %19 = sbr.rel (%p17) target = $region8
    $region5: #{tpu_custom_call.1} parent=1 // loop_body
      %s21 = ssub.s32 %s16, 1
      %s22 = ssub.s32 %s16, 2
      %s23 = sadd.s32 %s16, 1
      %s24 = ssub.s32 %s16, %s23
      %p25 = scmp.eq.s32.totalorder %s24, 0
      %s27 = sadd.s32 %s26, 1
      %s28 = scalar_select %p25, %s26, %s27
      %p31 = pneg %p25
      %p32 = scmp.eq.s32.totalorder %s16, 2
      %p33 = por %p31, %p32
      %p34 = scmp.ne.s32.totalorder %s26, %s29
      %p35 = scmp.eq.s32.totalorder %s16, 0
      %p36 = por %p34, %p35
      %p37 = scmp.ne.s32.totalorder %s26, %s29
      %p38 = scmp.eq.s32.totalorder %s21, 2
      %p39 = por %p37, %p38
      %p40 = scmp.ne.s32.totalorder %s29, %s30
      %p41 = scmp.eq.s32.totalorder %s21, 0
      %p42 = por %p40, %p41
      %p43 = scmp.ne.s32.totalorder %s29, %s30
      %p44 = scmp.eq.s32.totalorder %s22, 2
      %p45 = por %p43, %p44
      %p47 = scmp.ne.s32.totalorder %s30, %s46
      %p48 = scmp.eq.s32.totalorder %s22, 0
      %p49 = por %p47, %p48
      %s51 = sadd.s32 %s50, 1
      %p54 = scmp.eq.s32.totalorder %s16, 2
      %p55 = scmp.ne.s32.totalorder %s50, %s52
      %p56 = scmp.eq.s32.totalorder %s16, 0
      %p57 = por %p55, %p56
      %p58 = scmp.ne.s32.totalorder %s50, %s52
      %p59 = scmp.eq.s32.totalorder %s21, 2
      %p60 = por %p58, %p59
      %p61 = scmp.ne.s32.totalorder %s52, %s53
      %p62 = scmp.eq.s32.totalorder %s21, 0
      %p63 = por %p61, %p62
      %p64 = scmp.ne.s32.totalorder %s52, %s53
      %p65 = scmp.eq.s32.totalorder %s22, 2
      %p66 = por %p64, %p65
      %p68 = scmp.ne.s32.totalorder %s53, %s67
      %p69 = scmp.eq.s32.totalorder %s22, 0
      %p70 = por %p68, %p69
      %s72 = sadd.s32 %s71, 1
      %p75 = scmp.eq.s32.totalorder %s16, 2
      %p76 = scmp.ne.s32.totalorder %s71, %s73
      %p77 = scmp.eq.s32.totalorder %s16, 0
      %p78 = por %p76, %p77
      %p79 = scmp.ne.s32.totalorder %s71, %s73
      %p80 = scmp.eq.s32.totalorder %s21, 2
      %p81 = por %p79, %p80
      %p82 = scmp.ne.s32.totalorder %s73, %s74
      %p83 = scmp.eq.s32.totalorder %s21, 0
      %p84 = por %p82, %p83
      %p85 = scmp.ne.s32.totalorder %s73, %s74
      %p86 = scmp.eq.s32.totalorder %s22, 2
      %p87 = por %p85, %p86
      %p89 = scmp.ne.s32.totalorder %s74, %s88
      %p90 = scmp.eq.s32.totalorder %s22, 0
      %p91 = por %p89, %p90
      %s93 = sadd.s32 %s92, 1
      %p96 = scmp.eq.s32.totalorder %s16, 2
      %p97 = scmp.ne.s32.totalorder %s92, %s94
      %p98 = scmp.eq.s32.totalorder %s16, 0
      %p99 = por %p97, %p98
      %p100 = scmp.ne.s32.totalorder %s92, %s94
      %p101 = scmp.eq.s32.totalorder %s21, 2
      %p102 = por %p100, %p101
      %p103 = scmp.ne.s32.totalorder %s94, %s95
      %p104 = scmp.eq.s32.totalorder %s21, 0
      %p105 = por %p103, %p104
      %p106 = scmp.ne.s32.totalorder %s94, %s95
      %p107 = scmp.eq.s32.totalorder %s22, 2
      %p108 = por %p106, %p107
      %p110 = scmp.ne.s32.totalorder %s95, %s109
      %p111 = scmp.eq.s32.totalorder %s22, 0
      %p112 = por %p110, %p111
      %s114 = sadd.s32 %s113, 1
      %p117 = scmp.eq.s32.totalorder %s16, 2
      %p118 = scmp.ne.s32.totalorder %s113, %s115
      %p119 = scmp.eq.s32.totalorder %s16, 0
      %p120 = por %p118, %p119
      %p121 = scmp.ne.s32.totalorder %s113, %s115
      %p122 = scmp.eq.s32.totalorder %s21, 2
      %p123 = por %p121, %p122
      %p124 = scmp.ne.s32.totalorder %s115, %s116
      %p125 = scmp.eq.s32.totalorder %s21, 0
      %p126 = por %p124, %p125
      %p127 = scmp.ne.s32.totalorder %s115, %s116
      %p128 = scmp.eq.s32.totalorder %s22, 2
      %p129 = por %p127, %p128
      %p131 = scmp.ne.s32.totalorder %s116, %s130
      %p132 = scmp.eq.s32.totalorder %s22, 0
      %p133 = por %p131, %p132
      %s135 = sadd.s32 %s134, 1
      %p138 = scmp.eq.s32.totalorder %s16, 2
      %p139 = scmp.ne.s32.totalorder %s134, %s136
      %p140 = scmp.eq.s32.totalorder %s16, 0
      %p141 = por %p139, %p140
      %p142 = scmp.ne.s32.totalorder %s134, %s136
      %p143 = scmp.eq.s32.totalorder %s21, 2
      %p144 = por %p142, %p143
      %p145 = scmp.ne.s32.totalorder %s136, %s137
      %p146 = scmp.eq.s32.totalorder %s21, 0
      %p147 = por %p145, %p146
      %p148 = scmp.ne.s32.totalorder %s136, %s137
      %p149 = scmp.eq.s32.totalorder %s22, 2
      %p150 = por %p148, %p149
      %p152 = scmp.ne.s32.totalorder %s137, %s151
      %p153 = scmp.eq.s32.totalorder %s22, 0
      %p154 = por %p152, %p153
      %s156 = sadd.s32 %s155, 1
      %p159 = scmp.eq.s32.totalorder %s16, 2
      %p160 = scmp.ne.s32.totalorder %s155, %s157
      %p161 = scmp.eq.s32.totalorder %s16, 0
      %p162 = por %p160, %p161
      %p163 = scmp.ne.s32.totalorder %s155, %s157
      %p164 = scmp.eq.s32.totalorder %s21, 2
      %p165 = por %p163, %p164
      %p166 = scmp.ne.s32.totalorder %s157, %s158
      %p167 = scmp.eq.s32.totalorder %s21, 0
      %p168 = por %p166, %p167
      %p169 = scmp.ne.s32.totalorder %s157, %s158
      %p170 = scmp.eq.s32.totalorder %s22, 2
      %p171 = por %p169, %p170
      %p173 = scmp.ne.s32.totalorder %s158, %s172
      %p174 = scmp.eq.s32.totalorder %s22, 0
      %p175 = por %p173, %p174
      %s176 = ssub.s32 %s16, %s23
      %p177 = scmp.eq.s32.totalorder %s176, 0
      %s179 = sadd.s32 %s178, 1
      %s180 = scalar_select %p177, %s178, %s179
      %p183 = pneg %p177
      %p184 = scmp.eq.s32.totalorder %s16, 2
      %p185 = por %p183, %p184
      %p186 = scmp.ne.s32.totalorder %s178, %s181
      %p187 = scmp.eq.s32.totalorder %s16, 0
      %p188 = por %p186, %p187
      %p189 = scmp.ne.s32.totalorder %s178, %s181
      %p190 = scmp.eq.s32.totalorder %s21, 2
      %p191 = por %p189, %p190
      %p192 = scmp.ne.s32.totalorder %s181, %s182
      %p193 = scmp.eq.s32.totalorder %s21, 0
      %p194 = por %p192, %p193
      %p195 = scmp.ne.s32.totalorder %s181, %s182
      %p196 = scmp.eq.s32.totalorder %s22, 2
      %p197 = por %p195, %p196
      %p199 = scmp.ne.s32.totalorder %s182, %s198
      %p200 = scmp.eq.s32.totalorder %s22, 0
      %p201 = por %p199, %p200
      %p202 = scmp.le.s32.totalorder 1, %s16
      %p203 = scmp.lt.s32.totalorder %s16, 4
      %p204 = pnand %p202, %p203
      %p205 = pneg %p204
      // Predicated region
      $region9: #{tpu_custom_call.1} parent=5 // pred_check
        _
      $region10: #{tpu_custom_call.1} parent=5 // pred_check_branch
        %207 = sbr.rel (%p204) target = $region12
      $region11: #{tpu_custom_call.1} parent=5 // pred_region
        %s208 = ssub.s32 %s16, 1
        // Predicated region
        $region13: #{tpu_custom_call.1} parent=11 // pred_check
          %p209 = pneg %p63
        $region14: #{tpu_custom_call.1} parent=11 // pred_check_branch
          %211 = sbr.rel (%p209) target = $region16
        $region15: #{tpu_custom_call.1} parent=11 // pred_region
          _
        $region16: #{tpu_custom_call.1} parent=11 // pred_fallthru
          _
        // Predicated region
        $region17: #{tpu_custom_call.1} parent=11 // pred_check
          %p212 = pneg %p84
        $region18: #{tpu_custom_call.1} parent=11 // pred_check_branch
          %214 = sbr.rel (%p212) target = $region20
        $region19: #{tpu_custom_call.1} parent=11 // pred_region
          _
        $region20: #{tpu_custom_call.1} parent=11 // pred_fallthru
          _
        // Predicated region
        $region21: #{tpu_custom_call.1} parent=11 // pred_check
          %p215 = pneg %p105
        $region22: #{tpu_custom_call.1} parent=11 // pred_check_branch
          %217 = sbr.rel (%p215) target = $region24
        $region23: #{tpu_custom_call.1} parent=11 // pred_region
          _
        $region24: #{tpu_custom_call.1} parent=11 // pred_fallthru
          _
        // Predicated region
        $region25: #{tpu_custom_call.1} parent=11 // pred_check
          %p218 = pneg %p126
        $region26: #{tpu_custom_call.1} parent=11 // pred_check_branch
          %220 = sbr.rel (%p218) target = $region28
        $region27: #{tpu_custom_call.1} parent=11 // pred_region
          _
        $region28: #{tpu_custom_call.1} parent=11 // pred_fallthru
          _
        // Predicated region
        $region29: #{tpu_custom_call.1} parent=11 // pred_check
          %p221 = pneg %p147
        $region30: #{tpu_custom_call.1} parent=11 // pred_check_branch
          %223 = sbr.rel (%p221) target = $region32
        $region31: #{tpu_custom_call.1} parent=11 // pred_region
          _
        $region32: #{tpu_custom_call.1} parent=11 // pred_fallthru
          _
        // Predicated region
        $region33: #{tpu_custom_call.1} parent=11 // pred_check
          %p224 = pneg %p168
        $region34: #{tpu_custom_call.1} parent=11 // pred_check_branch
          %226 = sbr.rel (%p224) target = $region36
        $region35: #{tpu_custom_call.1} parent=11 // pred_region
          _
        $region36: #{tpu_custom_call.1} parent=11 // pred_fallthru
          _
      $region12: #{tpu_custom_call.1} parent=5 // pred_fallthru
        _
      %p227 = scmp.lt.s32.totalorder %s16, 3
      // Predicated region
      $region37: #{tpu_custom_call.1} parent=5 // pred_check
        %p228 = pneg %p227
      $region38: #{tpu_custom_call.1} parent=5 // pred_check_branch
        %230 = sbr.rel (%p228) target = $region40
      $region39: #{tpu_custom_call.1} parent=5 // pred_region
        // Predicated region
        $region41: #{tpu_custom_call.1} parent=39 // pred_check
          %p231 = pneg %p36
        $region42: #{tpu_custom_call.1} parent=39 // pred_check_branch
          %233 = sbr.rel (%p231) target = $region44
        $region43: #{tpu_custom_call.1} parent=39 // pred_region
          %s234 = smul.u32 4, %s16
          %p235 = scmp.lt.s32.totalorder %s234, 11
          %s236 = scalar_select %p235, %s234, 11
          %s237 = smul.addr %s236, 8
          %s238 = scalar_lea.vmem %s0, %s237
          %s239 = smul.u32 4, %s16
        $region44: #{tpu_custom_call.1} parent=39 // pred_fallthru
          _
      $region40: #{tpu_custom_call.1} parent=5 // pred_fallthru
        _
      %p240 = scmp.le.s32.totalorder 1, %s16
      %p241 = scmp.lt.s32.totalorder %s16, 4
      %p242 = pnand %p240, %p241
      %p243 = pneg %p242
      // Predicated region
      $region45: #{tpu_custom_call.1} parent=5 // pred_check
        _
      $region46: #{tpu_custom_call.1} parent=5 // pred_check_branch
        %245 = sbr.rel (%p242) target = $region48
      $region47: #{tpu_custom_call.1} parent=5 // pred_region
        %s246 = ssub.s32 %s16, 1
        %s247 = smul.u32 4, %s21
        %p248 = scmp.lt.s32.totalorder %s247, 11
        %s249 = scalar_select %p248, %s247, 11
        %s250 = smul.addr %s249, 8
        %s251 = scalar_lea.vmem %s0, %s250
        %p252 = pneg %p42
        %p253 = pneg %p39
        %p254 = pneg %p63
        %p255 = pneg %p60
        %p256 = pneg %p84
        %p257 = pneg %p81
        %p258 = pneg %p105
        %p259 = pneg %p102
        %p260 = pneg %p126
        %p261 = pneg %p123
        %p262 = pneg %p147
        %p263 = pneg %p144
        %p264 = pneg %p168
        %p265 = pneg %p165
        %p266 = pneg %p194
        %p267 = pneg %p191
        %s268 = sand.u32 %s181, 1
        %s269 = scalar_lea.sflag [#allocation3], %s268
        %s270 = sand.u32 %s181, 1
        %s271 = smul.addr %s270, 64
        %s272 = scalar_lea.vmem [#allocation2], %s271
        %s273 = smul.u32 4, %s21
        %p274 = scmp.lt.s32.totalorder %s273, 11
        %s275 = scalar_select %p274, %s273, 11
        %s276 = smul.addr %s275, 8
        %s277 = scalar_lea.vmem %s0, %s276
        %s278 = smul.u32 4, %s21
        %s279 = smul.u32 4, %s21
        %v280 = vld [vmem:[%s277] sm:$0xff]
        %v281 = vld [vmem:[%s277 + $0x8] sm:$0xff]
        %v282 = vld [vmem:[%s277 + $0x10] sm:$0xff]
        %v283 = vld [vmem:[%s277 + $0x18] sm:$0xff]
        %v284 = vld [vmem:[%s1] sm:$0x1]
        %286 = vset.pattern.permute.xlu0 0
        %287 = vperm.xlu0 %286, %v280
        %v288 = vpop.permute.xlu0 %287
        %291 = vset.pattern.permute.xlu0 0
        %292 = vperm.xlu0 %291, %v281
        %v293 = vpop.permute.xlu0 %292
        %296 = vset.pattern.permute.xlu0 0
        %297 = vperm.xlu0 %296, %v282
        %v298 = vpop.permute.xlu0 %297
        %301 = vset.pattern.permute.xlu0 0
        %302 = vperm.xlu0 %301, %v283
        %v303 = vpop.permute.xlu0 %302
        %v306 = vlaneseq
        %v307 = vshrl.u32 %v306, 7
        %v308 = vsub.s32 0, %v307
        %v309 = vrot.slane %v284, %v308
        %v311 = vmul.f32 %v288, %v309
        %v312 = vmul.f32 %v293, %v309
        %v313 = vmul.f32 %v298, %v309
        %v314 = vmul.f32 %v303, %v309
        %v315 = vld [vmem:[%s2] sm:$0x1]
        %v317 = vlaneseq
        %v318 = vshrl.u32 %v317, 7
        %v319 = vsub.s32 0, %v318
        %v320 = vrot.slane %v315, %v319
        %v322 = vadd.f32 %v311, %v320
        %v323 = vadd.f32 %v312, %v320
        %v324 = vadd.f32 %v313, %v320
        %v325 = vadd.f32 %v314, %v320
        %vm326 = vcmp.gt.f32.partialorder %v322, 0.0
        %vm327 = vcmp.gt.f32.partialorder %v323, 0.0
        %vm328 = vcmp.gt.f32.partialorder %v324, 0.0
        %vm329 = vcmp.gt.f32.partialorder %v325, 0.0
        %v330 = vmin.f32 %v322, 0.0
        %v331 = vmin.f32 %v323, 0.0
        %v332 = vmin.f32 %v324, 0.0
        %v333 = vmin.f32 %v325, 0.0
        %v334 = vmul.f32 %v330, 1.442695
        %v335 = vpow.pop %v334
        %v336 = vmul.f32 %v331, 1.442695
        %v337 = vpow.pop %v336
        %v338 = vmul.f32 %v332, 1.442695
        %v339 = vpow.pop %v338
        %v340 = vmul.f32 %v333, 1.442695
        %v341 = vpow.pop %v340
        %v342 = vsub.f32 %v335, 1.0
        %v343 = vsub.f32 %v337, 1.0
        %v344 = vsub.f32 %v339, 1.0
        %v345 = vsub.f32 %v341, 1.0
        %v346 = vmul.f32 %v342, 1.6732632
        %v347 = vmul.f32 %v343, 1.6732632
        %v348 = vmul.f32 %v344, 1.6732632
        %v349 = vmul.f32 %v345, 1.6732632
        %v350 = vsel %vm326, %v322, %v346
        %v351 = vsel %vm327, %v323, %v347
        %v352 = vsel %vm328, %v324, %v348
        %v353 = vsel %vm329, %v325, %v349
        %v354 = vld [vmem:[%s3] sm:$0xff]
        %v355 = vld [vmem:[%s3 + $0x8] sm:$0xff]
        %v356 = vld [vmem:[%s3 + $0x10] sm:$0xff]
        %v357 = vld [vmem:[%s3 + $0x18] sm:$0xff]
        %v358 = vld [vmem:[%s3 + $0x20] sm:$0xff]
        %v359 = vld [vmem:[%s3 + $0x28] sm:$0xff]
        %v360 = vld [vmem:[%s3 + $0x30] sm:$0xff]
        %v361 = vld [vmem:[%s3 + $0x38] sm:$0xff]
        %v362 = vld [vmem:[%s3 + $0x40] sm:$0xff]
        %v363 = vld [vmem:[%s3 + $0x48] sm:$0xff]
        %v364 = vld [vmem:[%s3 + $0x50] sm:$0xff]
        %v365 = vld [vmem:[%s3 + $0x58] sm:$0xff]
        %v366 = vld [vmem:[%s3 + $0x60] sm:$0xff]
        %v367 = vld [vmem:[%s3 + $0x68] sm:$0xff]
        %v368 = vld [vmem:[%s3 + $0x70] sm:$0xff]
        %v369 = vld [vmem:[%s3 + $0x78] sm:$0xff]
        %v370 = vld [vmem:[%s3 + $0x80] sm:$0xff]
        %v371 = vld [vmem:[%s3 + $0x88] sm:$0xff]
        %v372 = vld [vmem:[%s3 + $0x90] sm:$0xff]
        %v373 = vld [vmem:[%s3 + $0x98] sm:$0xff]
        %v374 = vld [vmem:[%s3 + $0xa0] sm:$0xff]
        %v375 = vld [vmem:[%s3 + $0xa8] sm:$0xff]
        %v376 = vld [vmem:[%s3 + $0xb0] sm:$0xff]
        %v377 = vld [vmem:[%s3 + $0xb8] sm:$0xff]
        %v378 = vld [vmem:[%s3 + $0xc0] sm:$0xff]
        %v379 = vld [vmem:[%s3 + $0xc8] sm:$0xff]
        %v380 = vld [vmem:[%s3 + $0xd0] sm:$0xff]
        %v381 = vld [vmem:[%s3 + $0xd8] sm:$0xff]
        %v382 = vld [vmem:[%s3 + $0xe0] sm:$0xff]
        %v383 = vld [vmem:[%s3 + $0xe8] sm:$0xff]
        %v384 = vld [vmem:[%s3 + $0xf0] sm:$0xff]
        %v385 = vld [vmem:[%s3 + $0xf8] sm:$0xff]
        %v386 = vld [vmem:[%s4] sm:$0x3]
        %v388 = vlaneseq
        %v389 = vshrl.u32 %v388, 7
        %v390 = vsub.s32 0, %v389
        %v391 = vrot.slane %v386, %v390
        %v392 = vlaneseq
        %v393 = vshrl.u32 %v392, 7
        %v394 = vsub.s32 1, %v393
        %v395 = vrot.slane %v386, %v394
        %398 = vmatprep.subr.mxu0 %v355
        %399 = vmatpush1.msra.mxu0 %v354
        %400 = vmatprep.subr.mxu0 %v357
        %401 = vmatpush1.msra.mxu0 %v356
        %402 = vmatprep.subr.mxu0 %v359
        %403 = vmatpush1.msra.mxu0 %v358
        %404 = vmatprep.subr.mxu0 %v361
        %405 = vmatpush1.msra.mxu0 %v360
        %406 = vmatprep.subr.mxu0 %v363
        %407 = vmatpush1.msra.mxu0 %v362
        %408 = vmatprep.subr.mxu0 %v365
        %409 = vmatpush1.msra.mxu0 %v364
        %410 = vmatprep.subr.mxu0 %v367
        %411 = vmatpush1.msra.mxu0 %v366
        %412 = vmatprep.subr.mxu0 %v369
        %413 = vmatpush1.msra.mxu0 %v368
        %414 = vmatprep.subr.mxu0 %v371
        %415 = vmatpush1.msra.mxu0 %v370
        %416 = vmatprep.subr.mxu0 %v373
        %417 = vmatpush1.msra.mxu0 %v372
        %418 = vmatprep.subr.mxu0 %v375
        %419 = vmatpush1.msra.mxu0 %v374
        %420 = vmatprep.subr.mxu0 %v377
        %421 = vmatpush1.msra.mxu0 %v376
        %422 = vmatprep.subr.mxu0 %v379
        %423 = vmatpush1.msra.mxu0 %v378
        %424 = vmatprep.subr.mxu0 %v381
        %425 = vmatpush1.msra.mxu0 %v380
        %426 = vmatprep.subr.mxu0 %v383
        %427 = vmatpush1.msra.mxu0 %v382
        %428 = vmatprep.subr.mxu0 %v385
        %429 = vmatpush1.msra.mxu0 %v384
        %430 = vmatprep.subr.mxu0 0.0
        %431 = vmatpush1.msra.mxu0 0.0
        %432 = vmatprep.subr.mxu0 0.0
        %433 = vmatpush1.msra.mxu0 0.0
        %434 = vmatprep.subr.mxu0 0.0
        %435 = vmatpush1.msra.mxu0 0.0
        %436 = vmatprep.subr.mxu0 0.0
        %437 = vmatpush1.msra.mxu0 0.0
        %438 = vmatprep.subr.mxu0 0.0
        %439 = vmatpush1.msra.mxu0 0.0
        %440 = vmatprep.subr.mxu0 0.0
        %441 = vmatpush1.msra.mxu0 0.0
        %442 = vmatprep.subr.mxu0 0.0
        %443 = vmatpush1.msra.mxu0 0.0
        %444 = vmatprep.subr.mxu0 0.0
        %445 = vmatpush1.msra.mxu0 0.0
        %446 = vmatprep.subr.mxu0 0.0
        %447 = vmatpush1.msra.mxu0 0.0
        %448 = vmatprep.subr.mxu0 0.0
        %449 = vmatpush1.msra.mxu0 0.0
        %450 = vmatprep.subr.mxu0 0.0
        %451 = vmatpush1.msra.mxu0 0.0
        %452 = vmatprep.subr.mxu0 0.0
        %453 = vmatpush1.msra.mxu0 0.0
        %454 = vmatprep.subr.mxu0 0.0
        %455 = vmatpush1.msra.mxu0 0.0
        %456 = vmatprep.subr.mxu0 0.0
        %457 = vmatpush1.msra.mxu0 0.0
        %458 = vmatprep.subr.mxu0 0.0
        %459 = vmatpush1.msra.mxu0 0.0
        %460 = vmatprep.subr.mxu0 0.0
        %461 = vmatpush1.msra.mxu0 0.0
        %462 = vmatprep.mubr.f32.mxu0 0.0
        %463 = vmatmul.mubr.f32.gmra.mrb[0].mxu0 %v350
        %v464 = vpop.f32.mrb[0].mxu0
        %v465 = vadd.f32 %v391, %v464
        %v466 = vpop.f32.mrb[0].mxu0
        %v467 = vadd.f32 %v395, %v466
        %468 = vmatprep.mubr.f32.mxu0 0.0
        %469 = vmatmul.mubr.f32.gmra.mrb[0].mxu0 %v351
        %v470 = vpop.f32.mrb[0].mxu0
        %v471 = vadd.f32 %v391, %v470
        %v472 = vpop.f32.mrb[0].mxu0
        %v473 = vadd.f32 %v395, %v472
        %474 = vmatprep.mubr.f32.mxu0 0.0
        %475 = vmatmul.mubr.f32.gmra.mrb[0].mxu0 %v352
        %v476 = vpop.f32.mrb[0].mxu0
        %v477 = vadd.f32 %v391, %v476
        %v478 = vpop.f32.mrb[0].mxu0
        %v479 = vadd.f32 %v395, %v478
        %480 = vmatprep.mubr.f32.mxu0 0.0
        %481 = vmatmul.mubr.f32.gmra.mrb[0].mxu0 %v353
        %v482 = vpop.f32.mrb[0].mxu0
        %v483 = vadd.f32 %v391, %v482
        %v484 = vpop.f32.mrb[0].mxu0
        %v485 = vadd.f32 %v395, %v484
        %486 = vdwg.mxu0
        %vm487 = vcmp.gt.f32.partialorder %v465, 0.0
        %vm488 = vcmp.gt.f32.partialorder %v467, 0.0
        %vm489 = vcmp.gt.f32.partialorder %v471, 0.0
        %vm490 = vcmp.gt.f32.partialorder %v473, 0.0
        %vm491 = vcmp.gt.f32.partialorder %v477, 0.0
        %vm492 = vcmp.gt.f32.partialorder %v479, 0.0
        %vm493 = vcmp.gt.f32.partialorder %v483, 0.0
        %vm494 = vcmp.gt.f32.partialorder %v485, 0.0
        %v495 = vmin.f32 %v465, 0.0
        %v496 = vmin.f32 %v467, 0.0
        %v497 = vmin.f32 %v471, 0.0
        %v498 = vmin.f32 %v473, 0.0
        %v499 = vmin.f32 %v477, 0.0
        %v500 = vmin.f32 %v479, 0.0
        %v501 = vmin.f32 %v483, 0.0
        %v502 = vmin.f32 %v485, 0.0
        %v503 = vmul.f32 %v495, 1.442695
        %v504 = vpow.pop %v503
        %v505 = vmul.f32 %v496, 1.442695
        %v506 = vpow.pop %v505
        %v507 = vmul.f32 %v497, 1.442695
        %v508 = vpow.pop %v507
        %v509 = vmul.f32 %v498, 1.442695
        %v510 = vpow.pop %v509
        %v511 = vmul.f32 %v499, 1.442695
        %v512 = vpow.pop %v511
        %v513 = vmul.f32 %v500, 1.442695
        %v514 = vpow.pop %v513
        %v515 = vmul.f32 %v501, 1.442695
        %v516 = vpow.pop %v515
        %v517 = vmul.f32 %v502, 1.442695
        %v518 = vpow.pop %v517
        %v519 = vsub.f32 %v504, 1.0
        %v520 = vsub.f32 %v506, 1.0
        %v521 = vsub.f32 %v508, 1.0
        %v522 = vsub.f32 %v510, 1.0
        %v523 = vsub.f32 %v512, 1.0
        %v524 = vsub.f32 %v514, 1.0
        %v525 = vsub.f32 %v516, 1.0
        %v526 = vsub.f32 %v518, 1.0
        %v527 = vmul.f32 %v519, 1.6732632
        %v528 = vmul.f32 %v520, 1.6732632
        %v529 = vmul.f32 %v521, 1.6732632
        %v530 = vmul.f32 %v522, 1.6732632
        %v531 = vmul.f32 %v523, 1.6732632
        %v532 = vmul.f32 %v524, 1.6732632
        %v533 = vmul.f32 %v525, 1.6732632
        %v534 = vmul.f32 %v526, 1.6732632
        %v535 = vsel %vm487, %v465, %v527
        %v536 = vsel %vm488, %v467, %v528
        %v537 = vsel %vm489, %v471, %v529
        %v538 = vsel %vm490, %v473, %v530
        %v539 = vsel %vm491, %v477, %v531
        %v540 = vsel %vm492, %v479, %v532
        %v541 = vsel %vm493, %v483, %v533
        %v542 = vsel %vm494, %v485, %v534
        %v543 = vld [vmem:[%s5] sm:$0xff]
        %v544 = vld [vmem:[%s5 + $0x8] sm:$0xff]
        %v545 = vld [vmem:[%s5 + $0x10] sm:$0xff]
        %v546 = vld [vmem:[%s5 + $0x18] sm:$0xff]
        %v547 = vld [vmem:[%s5 + $0x20] sm:$0xff]
        %v548 = vld [vmem:[%s5 + $0x28] sm:$0xff]
        %v549 = vld [vmem:[%s5 + $0x30] sm:$0xff]
        %v550 = vld [vmem:[%s5 + $0x38] sm:$0xff]
        %v551 = vld [vmem:[%s5 + $0x40] sm:$0xff]
        %v552 = vld [vmem:[%s5 + $0x48] sm:$0xff]
        %v553 = vld [vmem:[%s5 + $0x50] sm:$0xff]
        %v554 = vld [vmem:[%s5 + $0x58] sm:$0xff]
        %v555 = vld [vmem:[%s5 + $0x60] sm:$0xff]
        %v556 = vld [vmem:[%s5 + $0x68] sm:$0xff]
        %v557 = vld [vmem:[%s5 + $0x70] sm:$0xff]
        %v558 = vld [vmem:[%s5 + $0x78] sm:$0xff]
        %v559 = vld [vmem:[%s5 + $0x80] sm:$0xff]
        %v560 = vld [vmem:[%s5 + $0x88] sm:$0xff]
        %v561 = vld [vmem:[%s5 + $0x90] sm:$0xff]
        %v562 = vld [vmem:[%s5 + $0x98] sm:$0xff]
        %v563 = vld [vmem:[%s5 + $0xa0] sm:$0xff]
        %v564 = vld [vmem:[%s5 + $0xa8] sm:$0xff]
        %v565 = vld [vmem:[%s5 + $0xb0] sm:$0xff]
        %v566 = vld [vmem:[%s5 + $0xb8] sm:$0xff]
        %v567 = vld [vmem:[%s5 + $0xc0] sm:$0xff]
        %v568 = vld [vmem:[%s5 + $0xc8] sm:$0xff]
        %v569 = vld [vmem:[%s5 + $0xd0] sm:$0xff]
        %v570 = vld [vmem:[%s5 + $0xd8] sm:$0xff]
        %v571 = vld [vmem:[%s5 + $0xe0] sm:$0xff]
        %v572 = vld [vmem:[%s5 + $0xe8] sm:$0xff]
        %v573 = vld [vmem:[%s5 + $0xf0] sm:$0xff]
        %v574 = vld [vmem:[%s5 + $0xf8] sm:$0xff]
        %v575 = vld [vmem:[%s5 + $0x100] sm:$0xff]
        %v576 = vld [vmem:[%s5 + $0x108] sm:$0xff]
        %v577 = vld [vmem:[%s5 + $0x110] sm:$0xff]
        %v578 = vld [vmem:[%s5 + $0x118] sm:$0xff]
        %v579 = vld [vmem:[%s5 + $0x120] sm:$0xff]
        %v580 = vld [vmem:[%s5 + $0x128] sm:$0xff]
        %v581 = vld [vmem:[%s5 + $0x130] sm:$0xff]
        %v582 = vld [vmem:[%s5 + $0x138] sm:$0xff]
        %v583 = vld [vmem:[%s5 + $0x140] sm:$0xff]
        %v584 = vld [vmem:[%s5 + $0x148] sm:$0xff]
        %v585 = vld [vmem:[%s5 + $0x150] sm:$0xff]
        %v586 = vld [vmem:[%s5 + $0x158] sm:$0xff]
        %v587 = vld [vmem:[%s5 + $0x160] sm:$0xff]
        %v588 = vld [vmem:[%s5 + $0x168] sm:$0xff]
        %v589 = vld [vmem:[%s5 + $0x170] sm:$0xff]
        %v590 = vld [vmem:[%s5 + $0x178] sm:$0xff]
        %v591 = vld [vmem:[%s5 + $0x180] sm:$0xff]
        %v592 = vld [vmem:[%s5 + $0x188] sm:$0xff]
        %v593 = vld [vmem:[%s5 + $0x190] sm:$0xff]
        %v594 = vld [vmem:[%s5 + $0x198] sm:$0xff]
        %v595 = vld [vmem:[%s5 + $0x1a0] sm:$0xff]
        %v596 = vld [vmem:[%s5 + $0x1a8] sm:$0xff]
        %v597 = vld [vmem:[%s5 + $0x1b0] sm:$0xff]
        %v598 = vld [vmem:[%s5 + $0x1b8] sm:$0xff]
        %v599 = vld [vmem:[%s5 + $0x1c0] sm:$0xff]
        %v600 = vld [vmem:[%s5 + $0x1c8] sm:$0xff]
        %v601 = vld [vmem:[%s5 + $0x1d0] sm:$0xff]
        %v602 = vld [vmem:[%s5 + $0x1d8] sm:$0xff]
        %v603 = vld [vmem:[%s5 + $0x1e0] sm:$0xff]
        %v604 = vld [vmem:[%s5 + $0x1e8] sm:$0xff]
        %v605 = vld [vmem:[%s5 + $0x1f0] sm:$0xff]
        %v606 = vld [vmem:[%s5 + $0x1f8] sm:$0xff]
        %v607 = vld [vmem:[%s6] sm:$0x3]
        %v609 = vlaneseq
        %v610 = vshrl.u32 %v609, 7
        %v611 = vsub.s32 0, %v610
        %v612 = vrot.slane %v607, %v611
        %v613 = vlaneseq
        %v614 = vshrl.u32 %v613, 7
        %v615 = vsub.s32 1, %v614
        %v616 = vrot.slane %v607, %v615
        %619 = vmatprep.subr.mxu0 %v544
        %620 = vmatpush1.msra.mxu0 %v543
        %621 = vmatprep.subr.mxu0 %v546
        %622 = vmatpush1.msra.mxu0 %v545
        %623 = vmatprep.subr.mxu0 %v548
        %624 = vmatpush1.msra.mxu0 %v547
        %625 = vmatprep.subr.mxu0 %v550
        %626 = vmatpush1.msra.mxu0 %v549
        %627 = vmatprep.subr.mxu0 %v552
        %628 = vmatpush1.msra.mxu0 %v551
        %629 = vmatprep.subr.mxu0 %v554
        %630 = vmatpush1.msra.mxu0 %v553
        %631 = vmatprep.subr.mxu0 %v556
        %632 = vmatpush1.msra.mxu0 %v555
        %633 = vmatprep.subr.mxu0 %v558
        %634 = vmatpush1.msra.mxu0 %v557
        %635 = vmatprep.subr.mxu0 %v560
        %636 = vmatpush1.msra.mxu0 %v559
        %637 = vmatprep.subr.mxu0 %v562
        %638 = vmatpush1.msra.mxu0 %v561
        %639 = vmatprep.subr.mxu0 %v564
        %640 = vmatpush1.msra.mxu0 %v563
        %641 = vmatprep.subr.mxu0 %v566
        %642 = vmatpush1.msra.mxu0 %v565
        %643 = vmatprep.subr.mxu0 %v568
        %644 = vmatpush1.msra.mxu0 %v567
        %645 = vmatprep.subr.mxu0 %v570
        %646 = vmatpush1.msra.mxu0 %v569
        %647 = vmatprep.subr.mxu0 %v572
        %648 = vmatpush1.msra.mxu0 %v571
        %649 = vmatprep.subr.mxu0 %v574
        %650 = vmatpush1.msra.mxu0 %v573
        %651 = vmatprep.subr.mxu0 %v576
        %652 = vmatpush1.msra.mxu0 %v575
        %653 = vmatprep.subr.mxu0 %v578
        %654 = vmatpush1.msra.mxu0 %v577
        %655 = vmatprep.subr.mxu0 %v580
        %656 = vmatpush1.msra.mxu0 %v579
        %657 = vmatprep.subr.mxu0 %v582
        %658 = vmatpush1.msra.mxu0 %v581
        %659 = vmatprep.subr.mxu0 %v584
        %660 = vmatpush1.msra.mxu0 %v583
        %661 = vmatprep.subr.mxu0 %v586
        %662 = vmatpush1.msra.mxu0 %v585
        %663 = vmatprep.subr.mxu0 %v588
        %664 = vmatpush1.msra.mxu0 %v587
        %665 = vmatprep.subr.mxu0 %v590
        %666 = vmatpush1.msra.mxu0 %v589
        %667 = vmatprep.subr.mxu0 %v592
        %668 = vmatpush1.msra.mxu0 %v591
        %669 = vmatprep.subr.mxu0 %v594
        %670 = vmatpush1.msra.mxu0 %v593
        %671 = vmatprep.subr.mxu0 %v596
        %672 = vmatpush1.msra.mxu0 %v595
        %673 = vmatprep.subr.mxu0 %v598
        %674 = vmatpush1.msra.mxu0 %v597
        %675 = vmatprep.subr.mxu0 %v600
        %676 = vmatpush1.msra.mxu0 %v599
        %677 = vmatprep.subr.mxu0 %v602
        %678 = vmatpush1.msra.mxu0 %v601
        %679 = vmatprep.subr.mxu0 %v604
        %680 = vmatpush1.msra.mxu0 %v603
        %681 = vmatprep.subr.mxu0 %v606
        %682 = vmatpush1.msra.mxu0 %v605
        %683 = vmatprep.mubr.f32.mxu0 %v536
        %684 = vmatmul.mubr.f32.gmra.mrb[0].mxu0 %v535
        %v685 = vpop.f32.mrb[0].mxu0
        %v686 = vadd.f32 %v612, %v685
        %v687 = vpop.f32.mrb[0].mxu0
        %v688 = vadd.f32 %v616, %v687
        %689 = vmatprep.mubr.f32.mxu0 %v538
        %690 = vmatmul.mubr.f32.gmra.mrb[0].mxu0 %v537
        %v691 = vpop.f32.mrb[0].mxu0
        %v692 = vadd.f32 %v612, %v691
        %v693 = vpop.f32.mrb[0].mxu0
        %v694 = vadd.f32 %v616, %v693
        %695 = vmatprep.mubr.f32.mxu0 %v540
        %696 = vmatmul.mubr.f32.gmra.mrb[0].mxu0 %v539
        %v697 = vpop.f32.mrb[0].mxu0
        %v698 = vadd.f32 %v612, %v697
        %v699 = vpop.f32.mrb[0].mxu0
        %v700 = vadd.f32 %v616, %v699
        %701 = vmatprep.mubr.f32.mxu0 %v542
        %702 = vmatmul.mubr.f32.gmra.mrb[0].mxu0 %v541
        %v703 = vpop.f32.mrb[0].mxu0
        %v704 = vadd.f32 %v612, %v703
        %v705 = vpop.f32.mrb[0].mxu0
        %v706 = vadd.f32 %v616, %v705
        %707 = vdwg.mxu0
        %vm708 = vcmp.gt.f32.partialorder %v686, 0.0
        %vm709 = vcmp.gt.f32.partialorder %v688, 0.0
        %vm710 = vcmp.gt.f32.partialorder %v692, 0.0
        %vm711 = vcmp.gt.f32.partialorder %v694, 0.0
        %vm712 = vcmp.gt.f32.partialorder %v698, 0.0
        %vm713 = vcmp.gt.f32.partialorder %v700, 0.0
        %vm714 = vcmp.gt.f32.partialorder %v704, 0.0
        %vm715 = vcmp.gt.f32.partialorder %v706, 0.0
        %v716 = vmin.f32 %v686, 0.0
        %v717 = vmin.f32 %v688, 0.0
        %v718 = vmin.f32 %v692, 0.0
        %v719 = vmin.f32 %v694, 0.0
        %v720 = vmin.f32 %v698, 0.0
        %v721 = vmin.f32 %v700, 0.0
        %v722 = vmin.f32 %v704, 0.0
        %v723 = vmin.f32 %v706, 0.0
        %v724 = vmul.f32 %v716, 1.442695
        %v725 = vpow.pop %v724
        %v726 = vmul.f32 %v717, 1.442695
        %v727 = vpow.pop %v726
        %v728 = vmul.f32 %v718, 1.442695
        %v729 = vpow.pop %v728
        %v730 = vmul.f32 %v719, 1.442695
        %v731 = vpow.pop %v730
        %v732 = vmul.f32 %v720, 1.442695
        %v733 = vpow.pop %v732
        %v734 = vmul.f32 %v721, 1.442695
        %v735 = vpow.pop %v734
        %v736 = vmul.f32 %v722, 1.442695
        %v737 = vpow.pop %v736
        %v738 = vmul.f32 %v723, 1.442695
        %v739 = vpow.pop %v738
        %v740 = vsub.f32 %v725, 1.0
        %v741 = vsub.f32 %v727, 1.0
        %v742 = vsub.f32 %v729, 1.0
        %v743 = vsub.f32 %v731, 1.0
        %v744 = vsub.f32 %v733, 1.0
        %v745 = vsub.f32 %v735, 1.0
        %v746 = vsub.f32 %v737, 1.0
        %v747 = vsub.f32 %v739, 1.0
        %v748 = vmul.f32 %v740, 1.6732632
        %v749 = vmul.f32 %v741, 1.6732632
        %v750 = vmul.f32 %v742, 1.6732632
        %v751 = vmul.f32 %v743, 1.6732632
        %v752 = vmul.f32 %v744, 1.6732632
        %v753 = vmul.f32 %v745, 1.6732632
        %v754 = vmul.f32 %v746, 1.6732632
        %v755 = vmul.f32 %v747, 1.6732632
        %v756 = vsel %vm708, %v686, %v748
        %v757 = vsel %vm709, %v688, %v749
        %v758 = vsel %vm710, %v692, %v750
        %v759 = vsel %vm711, %v694, %v751
        %v760 = vsel %vm712, %v698, %v752
        %v761 = vsel %vm713, %v700, %v753
        %v762 = vsel %vm714, %v704, %v754
        %v763 = vsel %vm715, %v706, %v755
        %v764 = vmul.f32 %v756, 1.050701
        %v765 = vmul.f32 %v757, 1.050701
        %v766 = vmul.f32 %v758, 1.050701
        %v767 = vmul.f32 %v759, 1.050701
        %v768 = vmul.f32 %v760, 1.050701
        %v769 = vmul.f32 %v761, 1.050701
        %v770 = vmul.f32 %v762, 1.050701
        %v771 = vmul.f32 %v763, 1.050701
        %772 = vst [vmem:[%s272] sm:$0xff] %v764
        %vm773 = vcmask 588800
        %774 = vst.msk [vmem:[%s272 + $0x8] sm:$0xff] %vm773, %v765
        %775 = vst [vmem:[%s272 + $0x10] sm:$0xff] %v766
        %776 = vst.msk [vmem:[%s272 + $0x18] sm:$0xff] %vm773, %v767
        %777 = vst [vmem:[%s272 + $0x20] sm:$0xff] %v768
        %778 = vst.msk [vmem:[%s272 + $0x28] sm:$0xff] %vm773, %v769
        %779 = vst [vmem:[%s272 + $0x30] sm:$0xff] %v770
        %780 = vst.msk [vmem:[%s272 + $0x38] sm:$0xff] %vm773, %v771
        %s781 = sand.u32 %s181, 1
        %s782 = scalar_lea.sflag [#allocation3], %s781
        %s783 = sand.u32 %s181, 1
        %s784 = smul.addr %s783, 64
        %s785 = scalar_lea.vmem [#allocation2], %s784
        // Predicated region
        $region49: #{tpu_custom_call.1} parent=47 // pred_check
          %p786 = pneg %p191
        $region50: #{tpu_custom_call.1} parent=47 // pred_check_branch
          %788 = sbr.rel (%p786) target = $region52
        $region51: #{tpu_custom_call.1} parent=47 // pred_region
          %s789 = smul.u32 4, %s21
          %s791 = ssub.s32 1024, 1024
          %792 = vsyncadd %s782, %s791
          %s793 = smul.addr %s789, 2
          %s794 = smul.addr %s793, 128
          %s795 = scalar_lea.hbm %s7, %s794
          %s796 = sshll.u32 %s785, 4
          %s797 = int_to_ptr.vmem [resolvable:$true] %s796
          %802 = dma.vmem_to_hbm [thread:$0]  %s797, 1024, %s795, %s782, 256, 256, 16
        $region52: #{tpu_custom_call.1} parent=47 // pred_fallthru
          _
      $region48: #{tpu_custom_call.1} parent=5 // pred_fallthru
        _
      %p803 = scmp.le.s32.totalorder 2, %s16
      // Predicated region
      $region53: #{tpu_custom_call.1} parent=5 // pred_check
        %p804 = pneg %p803
      $region54: #{tpu_custom_call.1} parent=5 // pred_check_branch
        %806 = sbr.rel (%p804) target = $region56
      $region55: #{tpu_custom_call.1} parent=5 // pred_region
        %s807 = ssub.s32 %s16, 2
        // Predicated region
        $region57: #{tpu_custom_call.1} parent=55 // pred_check
          %p808 = pneg %p197
        $region58: #{tpu_custom_call.1} parent=55 // pred_check_branch
          %810 = sbr.rel (%p808) target = $region60
        $region59: #{tpu_custom_call.1} parent=55 // pred_region
          %s811 = sand.u32 %s182, 1
          %s812 = scalar_lea.sflag [#allocation3], %s811
          %s813 = sand.u32 %s182, 1
          %s814 = smul.addr %s813, 64
          %s815 = scalar_lea.vmem [#allocation2], %s814
          %816 = dma.done %s812, 1024
        $region60: #{tpu_custom_call.1} parent=55 // pred_fallthru
          _
      $region56: #{tpu_custom_call.1} parent=5 // pred_fallthru
        _
    $region6: #{tpu_custom_call.1} parent=1 // loop_footer
      %s20 = sadd.s32 1, %s16
    $region7: #{tpu_custom_call.1} parent=1 // loop_footer_branch
      %15 = sbr.rel target = $region3
    $region8: #{tpu_custom_call.1} parent=1 // loop_exit
      _
    %817 = vsyncpa [#allocation3], 1
    %s818 = scalar_lea.sflag [#allocation3], 1
    %819 = vsyncpa %s818, 1

</llo_original>
